<compile_context>
chip_gen: v5e
topology: v5e:2x2
jax: 0.10.0
libtpu: 0.0.40
codegen_flags: <defaults>
</compile_context>

<pallas_src>
import functools

import jax
import jax.numpy as jnp
from jax.experimental import pallas as pl
from jax.experimental.pallas import tpu as pltpu


def _round_up(n, m):
    return ((n + m - 1) // m) * m


# ---------------------------------------------------------------------------
# Kernel: whole MLP forward for one batch tile.
#   x_ref : (bb, Dmax)        compute_dtype (zero-padded features)
#   w_ref : (L, Dmax, Dmax)   compute_dtype packed weights
#                             (layers 0..L-2 stored [in, out]; last layer
#                              stored transposed [out, in] -> lane-dense rows)
#   b_ref : (L, 1, Dmax)      float32 packed biases
#   o_ref : (bb, out_dim)     float32
# ---------------------------------------------------------------------------
def mlp_kernel(x_ref, w_ref, b_ref, o_ref, *, n_layers, out_dim, compute_dtype):
    h = x_ref[...]

    # Hidden layers: MXU dot (f32 accumulate), bias + relu on the VPU.
    # Python loop -> fully unrolled at trace time (n_layers is small/static).
    for l in range(n_layers - 1):
        acc = jnp.dot(h, w_ref[l], preferred_element_type=jnp.float32)
        h = jnp.maximum(acc + b_ref[l], 0.0).astype(compute_dtype)

    last = n_layers - 1
    if out_dim == 1:
        # VPU multiply + XLU lane-reduce instead of an N=1 MXU matmul.
        # Only the single lane-dense row of the (transposed) last weight is
        # loaded (static Ref slice -> no extra data movement).
        w_row = w_ref[last, 0:1, :].astype(jnp.float32)        # (1, Dmax)
        out = jnp.sum(h.astype(jnp.float32) * w_row, axis=-1, keepdims=True)
        out = out + b_ref[last, :, 0:1]
    else:
        # h @ w_last.T without an explicit transpose (contract lane dims).
        w_last = w_ref[last]                                   # (Dmax, Dmax)
        out = jax.lax.dot_general(
            h, w_last, (((1,), (1,)), ((), ())),
            preferred_element_type=jnp.float32,
        )
        out = out[:, :out_dim] + b_ref[last][:, :out_dim]

    o_ref[...] = out.astype(o_ref.dtype)


# ---------------------------------------------------------------------------
# Parameter construction (matches Network.network_init: orthogonal W, zero b).
# ---------------------------------------------------------------------------
def init_network_params(key, layer_num, input_dim, output_dim, hidden_dim):
    dims = [input_dim] + [hidden_dim] * (layer_num - 1) + [output_dim]
    ortho = jax.nn.initializers.orthogonal()
    ws, bs = [], []
    for i in range(len(dims) - 1):
        key, sub = jax.random.split(key)
        ws.append(ortho(sub, (dims[i], dims[i + 1]), jnp.float32))  # [in, out]
        bs.append(jnp.zeros((dims[i + 1],), jnp.float32))
    return ws, bs


def pack_network_params(ws, bs, compute_dtype=jnp.bfloat16):
    """Pack all layers into one weight slab + one bias slab (2 operands)."""
    L = len(ws)
    dmax = max([w.shape[0] for w in ws] + [w.shape[1] for w in ws])
    dmax = _round_up(max(dmax, 8), 8)
    w_slab = jnp.zeros((L, dmax, dmax), compute_dtype)
    b_slab = jnp.zeros((L, 1, dmax), jnp.float32)
    for l, (w, b) in enumerate(zip(ws, bs)):
        if l < L - 1:
            w_slab = w_slab.at[l, : w.shape[0], : w.shape[1]].set(
                w.astype(compute_dtype))
        else:
            # Last layer stored transposed: rows = output neurons (lane-dense).
            w_slab = w_slab.at[l, : w.shape[1], : w.shape[0]].set(
                w.T.astype(compute_dtype))
        b_slab = b_slab.at[l, 0, : b.shape[0]].set(b)
    meta = dict(layer_num=L, input_dim=ws[0].shape[0],
                output_dim=ws[-1].shape[1], dmax=dmax,
                compute_dtype=compute_dtype)
    return w_slab, b_slab, meta


# ---------------------------------------------------------------------------
# Pallas-backed Network.forward(x)
# ---------------------------------------------------------------------------
def network_forward(packed, x, *, block_b=128):
    w_slab, b_slab, meta = packed
    L = meta["layer_num"]
    dmax = meta["dmax"]
    out_dim = meta["output_dim"]
    cdt = meta["compute_dtype"]

    B, din = x.shape
    bb = max(8, min(_round_up(block_b, 8), _round_up(B, 8)))
    B_pad = _round_up(B, bb)

    xk = x.astype(cdt)
    if B_pad != B or din != dmax:
        # Single fused zero-pad of both the batch and feature axes.
        xk = jnp.pad(xk, ((0, B_pad - B), (0, dmax - din)))

    kernel = functools.partial(mlp_kernel, n_layers=L, out_dim=out_dim,
                               compute_dtype=cdt)
    n_blocks = B_pad // bb

    if n_blocks == 1:
        # Single tile: no grid, no degenerate pipeline, full-array VMEM blocks.
        out = pl.pallas_call(
            kernel,
            out_shape=jax.ShapeDtypeStruct((B_pad, out_dim), jnp.float32),
            in_specs=[pl.BlockSpec(memory_space=pltpu.MemorySpace.VMEM)] * 3,
            out_specs=pl.BlockSpec(memory_space=pltpu.MemorySpace.VMEM),
        )(xk, w_slab, b_slab)
    else:
        # Batched: tile the batch axis; "parallel" lets v7x use both TCs.
        # Weight/bias slabs map to the same block every step -> stay resident.
        out = pl.pallas_call(
            kernel,
            out_shape=jax.ShapeDtypeStruct((B_pad, out_dim), jnp.float32),
            grid=(n_blocks,),
            in_specs=[
                pl.BlockSpec((bb, dmax), lambda i: (i, 0)),
                pl.BlockSpec((L, dmax, dmax), lambda i: (0, 0, 0)),
                pl.BlockSpec((L, 1, dmax), lambda i: (0, 0, 0)),
            ],
            out_specs=pl.BlockSpec((bb, out_dim), lambda i: (i, 0)),
            compiler_params=pltpu.CompilerParams(
                dimension_semantics=("parallel",)),
        )(xk, w_slab, b_slab)

    return out[:B]


# ---------------------------------------------------------------------------
# Pure-JAX references.
# ---------------------------------------------------------------------------
def network_forward_ref(ws, bs, x, precision=None):
    """f32 reference with the exact module semantics."""
    h = x
    for i in range(len(ws) - 1):
        h = jnp.maximum(jnp.dot(h, ws[i], precision=precision) + bs[i], 0.0)
    return jnp.dot(h, ws[-1], precision=precision) + bs[-1]


def network_forward_matched_ref(ws, bs, x, compute_dtype):
    """Reference mirroring the kernel's bf16-in / f32-accumulate numerics."""
    h = x.astype(compute_dtype)
    for i in range(len(ws) - 1):
        acc = jnp.dot(h, ws[i].astype(compute_dtype),
                      preferred_element_type=jnp.float32)
        h = jnp.maximum(acc + bs[i], 0.0).astype(compute_dtype)
    wl = ws[-1].astype(compute_dtype).astype(jnp.float32)
    return jnp.dot(h.astype(jnp.float32), wl,
                   precision=jax.lax.Precision.HIGHEST) + bs[-1]


if __name__ == "__main__":
    key = jax.random.PRNGKey(0)
    kA_p, kA_x, kB_p, kB_x = jax.random.split(key, 4)

    # --- Config A: Network(layer_num=3, 32 -> 32 -> 32 -> 1), bf16 compute,
    #     batched (256 rows, 128-row tiles => grid=(2,), "parallel").
    ws_a, bs_a = init_network_params(kA_p, layer_num=3, input_dim=32,
                                     output_dim=1, hidden_dim=32)
    packed_a = pack_network_params(ws_a, bs_a, compute_dtype=jnp.bfloat16)
    x_a = jax.random.normal(kA_x, (256, 32), jnp.float32)

    out_a = jax.block_until_ready(network_forward(packed_a, x_a, block_b=128))
    ref_a_match = network_forward_matched_ref(ws_a, bs_a, x_a, jnp.bfloat16)
    ref_a_f32 = network_forward_ref(ws_a, bs_a, x_a,
                                    precision=jax.lax.Precision.HIGHEST)
    assert out_a.shape == (256, 1)
    assert jnp.allclose(out_a, ref_a_match, atol=2e-3, rtol=2e-3)
    assert jnp.allclose(out_a, ref_a_f32, atol=1e-1, rtol=1e-1)

    # --- Config B: Network(layer_num=2, 32 -> 32 -> 4), f32 compute,
    #     small batch (24 rows => single block, no-grid path, MXU last layer).
    ws_b, bs_b = init_network_params(kB_p, layer_num=2, input_dim=32,
                                     output_dim=4, hidden_dim=32)
    packed_b = pack_network_params(ws_b, bs_b, compute_dtype=jnp.float32)
    x_b = jax.random.normal(kB_x, (24, 32), jnp.float32)

    out_b = jax.block_until_ready(network_forward(packed_b, x_b))
    ref_b = network_forward_ref(ws_b, bs_b, x_b,
                                precision=jax.lax.Precision.HIGHEST)
    assert out_b.shape == (24, 4)
    assert jnp.allclose(out_b, ref_b, atol=1e-2, rtol=1e-2)

    print("KERNEL_OK")
</pallas_src>

<mosaic_0001>
module attributes {stable_mosaic.version = 11 : i64} {
  func.func @mlp_kernel(%arg0: i32, %arg1: memref<128x32xbf16, #tpu.memory_space<vmem>>, %arg2: memref<3x32x32xbf16, #tpu.memory_space<vmem>>, %arg3: memref<3x1x32xf32, #tpu.memory_space<vmem>>, %arg4: memref<128x1xf32, #tpu.memory_space<vmem>>) attributes {dimension_semantics = [#tpu.dimension_semantics<parallel>], iteration_bounds = array<i64: 2>, scalar_prefetch = 0 : i64, scratch_operands = 0 : i64, tpu.core_type = #tpu.core_type<tc>, window_params = [{transform_indices = @transform_0, window_bounds = array<i64: 128, 32>}, {pipeline_mode = #tpu.pipeline_mode<synchronous>, transform_indices = @transform_1, window_bounds = array<i64: 3, 32, 32>}, {pipeline_mode = #tpu.pipeline_mode<synchronous>, transform_indices = @transform_2, window_bounds = array<i64: 3, 1, 32>}, {transform_indices = @transform_3, window_bounds = array<i64: 128, 1>}]} {
    %c0 = arith.constant 0 : index
    %c0_0 = arith.constant 0 : index
    %0 = vector.load %arg1[%c0, %c0_0] : memref<128x32xbf16, #tpu.memory_space<vmem>>, vector<128x32xbf16>
    %c0_1 = arith.constant 0 : index
    %c0_2 = arith.constant 0 : index
    %c0_3 = arith.constant 0 : index
    %1 = vector.load %arg2[%c0_1, %c0_2, %c0_3] : memref<3x32x32xbf16, #tpu.memory_space<vmem>>, vector<1x32x32xbf16>
    %2 = vector.shape_cast %1 : vector<1x32x32xbf16> to vector<32x32xbf16>
    %cst = arith.constant dense<0.000000e+00> : vector<128x32xf32>
    %3 = tpu.matmul %0, %2, %cst {dimension_numbers = #tpu.dot_dimension_numbers<[1], [0], [0], [1], [0, 0, 1, 1], [], []>} : vector<128x32xbf16>, vector<32x32xbf16>, vector<128x32xf32> -> vector<128x32xf32>
    %c0_4 = arith.constant 0 : index
    %c0_5 = arith.constant 0 : index
    %c0_6 = arith.constant 0 : index
    %4 = vector.load %arg3[%c0_4, %c0_5, %c0_6] : memref<3x1x32xf32, #tpu.memory_space<vmem>>, vector<1x1x32xf32>
    %5 = vector.shape_cast %4 : vector<1x1x32xf32> to vector<1x32xf32>
    %6 = vector.broadcast %5 : vector<1x32xf32> to vector<128x32xf32>
    %7 = arith.addf %3, %6 : vector<128x32xf32>
    %cst_7 = arith.constant 0.000000e+00 : f32
    %8 = vector.broadcast %cst_7 : f32 to vector<128x32xf32>
    %9 = arith.maximumf %7, %8 : vector<128x32xf32>
    %10 = arith.truncf %9 : vector<128x32xf32> to vector<128x32xbf16>
    %c1 = arith.constant 1 : index
    %c0_8 = arith.constant 0 : index
    %c0_9 = arith.constant 0 : index
    %11 = vector.load %arg2[%c1, %c0_8, %c0_9] : memref<3x32x32xbf16, #tpu.memory_space<vmem>>, vector<1x32x32xbf16>
    %12 = vector.shape_cast %11 : vector<1x32x32xbf16> to vector<32x32xbf16>
    %cst_10 = arith.constant dense<0.000000e+00> : vector<128x32xf32>
    %13 = tpu.matmul %10, %12, %cst_10 {dimension_numbers = #tpu.dot_dimension_numbers<[1], [0], [0], [1], [0, 0, 1, 1], [], []>} : vector<128x32xbf16>, vector<32x32xbf16>, vector<128x32xf32> -> vector<128x32xf32>
    %c1_11 = arith.constant 1 : index
    %c0_12 = arith.constant 0 : index
    %c0_13 = arith.constant 0 : index
    %14 = vector.load %arg3[%c1_11, %c0_12, %c0_13] : memref<3x1x32xf32, #tpu.memory_space<vmem>>, vector<1x1x32xf32>
    %15 = vector.shape_cast %14 : vector<1x1x32xf32> to vector<1x32xf32>
    %16 = vector.broadcast %15 : vector<1x32xf32> to vector<128x32xf32>
    %17 = arith.addf %13, %16 : vector<128x32xf32>
    %cst_14 = arith.constant 0.000000e+00 : f32
    %18 = vector.broadcast %cst_14 : f32 to vector<128x32xf32>
    %19 = arith.maximumf %17, %18 : vector<128x32xf32>
    %20 = arith.truncf %19 : vector<128x32xf32> to vector<128x32xbf16>
    %c2 = arith.constant 2 : index
    %c0_15 = arith.constant 0 : index
    %c0_16 = arith.constant 0 : index
    %21 = vector.load %arg2[%c2, %c0_15, %c0_16] : memref<3x32x32xbf16, #tpu.memory_space<vmem>>, vector<1x1x32xbf16>
    %22 = vector.shape_cast %21 : vector<1x1x32xbf16> to vector<1x32xbf16>
    %23 = arith.extf %22 : vector<1x32xbf16> to vector<1x32xf32>
    %24 = arith.extf %20 : vector<128x32xbf16> to vector<128x32xf32>
    %25 = vector.broadcast %23 : vector<1x32xf32> to vector<128x32xf32>
    %26 = arith.mulf %24, %25 : vector<128x32xf32>
    %cst_17 = arith.constant dense<0.000000e+00> : vector<128xf32>
    %27 = vector.multi_reduction <add>, %26, %cst_17 [1] : vector<128x32xf32> to vector<128xf32>
    %28 = vector.shape_cast %27 : vector<128xf32> to vector<128x1xf32>
    %c2_18 = arith.constant 2 : index
    %c0_19 = arith.constant 0 : index
    %c0_20 = arith.constant 0 : index
    %29 = vector.load %arg3[%c2_18, %c0_19, %c0_20] : memref<3x1x32xf32, #tpu.memory_space<vmem>>, vector<1x1x1xf32>
    %30 = vector.shape_cast %29 : vector<1x1x1xf32> to vector<1x1xf32>
    %31 = vector.broadcast %30 : vector<1x1xf32> to vector<128x1xf32>
    %32 = arith.addf %28, %31 : vector<128x1xf32>
    %c0_21 = arith.constant 0 : index
    %c0_22 = arith.constant 0 : index
    %33 = vector.load %arg4[%c0_21, %c0_22] : memref<128x1xf32, #tpu.memory_space<vmem>>, vector<128x1xf32>
    tpu.vector_store %arg4[%c0_21, %c0_22], %32 {strides = array<i32>} : memref<128x1xf32, #tpu.memory_space<vmem>>, vector<128x1xf32>,
    return
  }
  func.func @transform_0(%arg0: i32) -> (i32, i32) {
    %c0_i32 = arith.constant 0 : i32
    %c0_i32_0 = arith.constant 0 : i32
    return %arg0, %c0_i32 : i32, i32
  }
  func.func @transform_1(%arg0: i32) -> (i32, i32, i32) {
    %c0_i32 = arith.constant 0 : i32
    %c0_i32_0 = arith.constant 0 : i32
    %c0_i32_1 = arith.constant 0 : i32
    %c0_i32_2 = arith.constant 0 : i32
    return %c0_i32, %c0_i32_0, %c0_i32_1 : i32, i32, i32
  }
  func.func @transform_2(%arg0: i32) -> (i32, i32, i32) {
    %c0_i32 = arith.constant 0 : i32
    %c0_i32_0 = arith.constant 0 : i32
    %c0_i32_1 = arith.constant 0 : i32
    %c0_i32_2 = arith.constant 0 : i32
    return %c0_i32, %c0_i32_0, %c0_i32_1 : i32, i32, i32
  }
  func.func @transform_3(%arg0: i32) -> (i32, i32) {
    %c0_i32 = arith.constant 0 : i32
    %c0_i32_0 = arith.constant 0 : i32
    return %arg0, %c0_i32 : i32, i32
  }
}

</mosaic_0001>

<llo_original>
// kernel: tpu_custom_call.1
$region0: #{tpu_custom_call.1}
  #allocation0 [shape = 'u32[]', space=smem, size = 0x4, offset = 0x4, fixed_abs, tag = 'smem constant byte address 0x4 - core index']
  #allocation1 [shape = 'u32[72,128]{1,0:T(1,128)}', space=vmem, size = 0x9000, scoped, tag = 'internal scratch']
  %s0 = inlined_call_operand.vmem [shape: bf16[256,32], index: 0, kind: input, shape index: {}]
  %s1 = inlined_call_operand.vmem [shape: bf16[3,32,32], index: 1, kind: input, shape index: {}]
  %s2 = inlined_call_operand.vmem [shape: f32[3,1,32], index: 2, kind: input, shape index: {}]
  %s3 = inlined_call_operand.vmem [shape: f32[256,1], index: 3, kind: output, shape index: {}]
  %s4 = sld [smem:[#allocation0]]
  $region45: #{tpu_custom_call.1} parent=0
    _
  %s6 = ssub.s32 1, %s4
  %s7 = scalar_select 0, %s6, %s4
  loop: start=0, step=1, limit=4
  $region2: #{tpu_custom_call.1} parent=0 // loop_pre_header
    _
  $region3: #{tpu_custom_call.1} parent=0 // loop_header
    %s9 = sphi 0, %s13
    %p10 = scmp.ge.s32.totalorder %s9, 4
    %s19 = sphi 0, %s21
    %s22 = sphi 0, %s19
    %s23 = sphi 0, %s22
    %s39 = sphi 0, %s23
    %s43 = sphi 0, %s43
    %s45 = sphi 0, %s43
    %s46 = sphi 0, %s45
    %s60 = sphi 0, %s46
    %s64 = sphi 0, %s64
    %s66 = sphi 0, %s64
    %s67 = sphi 0, %s66
    %s81 = sphi 0, %s67
    %s87 = sphi 0, %s89
    %s90 = sphi 0, %s87
    %s91 = sphi 0, %s90
    %s107 = sphi 0, %s91
  $region4: #{tpu_custom_call.1} parent=0 // loop_header_branch
    %12 = sbr.rel (%p10) target = $region8
  $region5: #{tpu_custom_call.1} parent=0 // loop_body
    %s14 = ssub.s32 %s9, 1
    %s15 = ssub.s32 %s9, 2
    %s16 = sadd.s32 %s9, 1
    %s17 = ssub.s32 %s9, %s16
    %p18 = scmp.eq.s32.totalorder %s17, 0
    %s20 = sadd.s32 %s19, 1
    %s21 = scalar_select %p18, %s19, %s20
    %p24 = pneg %p18
    %p25 = scmp.eq.s32.totalorder %s9, 1
    %p26 = por %p24, %p25
    %p27 = scmp.ne.s32.totalorder %s19, %s22
    %p28 = scmp.eq.s32.totalorder %s9, 0
    %p29 = por %p27, %p28
    %p30 = scmp.ne.s32.totalorder %s19, %s22
    %p31 = scmp.eq.s32.totalorder %s14, 1
    %p32 = por %p30, %p31
    %p33 = scmp.ne.s32.totalorder %s22, %s23
    %p34 = scmp.eq.s32.totalorder %s14, 0
    %p35 = por %p33, %p34
    %p36 = scmp.ne.s32.totalorder %s22, %s23
    %p37 = scmp.eq.s32.totalorder %s15, 1
    %p38 = por %p36, %p37
    %p40 = scmp.ne.s32.totalorder %s23, %s39
    %p41 = scmp.eq.s32.totalorder %s15, 0
    %p42 = por %p40, %p41
    %s44 = sadd.s32 %s43, 1
    %p47 = scmp.eq.s32.totalorder %s9, 1
    %p48 = scmp.ne.s32.totalorder %s43, %s45
    %p49 = scmp.eq.s32.totalorder %s9, 0
    %p50 = por %p48, %p49
    %p51 = scmp.ne.s32.totalorder %s43, %s45
    %p52 = scmp.eq.s32.totalorder %s14, 1
    %p53 = por %p51, %p52
    %p54 = scmp.ne.s32.totalorder %s45, %s46
    %p55 = scmp.eq.s32.totalorder %s14, 0
    %p56 = por %p54, %p55
    %p57 = scmp.ne.s32.totalorder %s45, %s46
    %p58 = scmp.eq.s32.totalorder %s15, 1
    %p59 = por %p57, %p58
    %p61 = scmp.ne.s32.totalorder %s46, %s60
    %p62 = scmp.eq.s32.totalorder %s15, 0
    %p63 = por %p61, %p62
    %s65 = sadd.s32 %s64, 1
    %p68 = scmp.eq.s32.totalorder %s9, 1
    %p69 = scmp.ne.s32.totalorder %s64, %s66
    %p70 = scmp.eq.s32.totalorder %s9, 0
    %p71 = por %p69, %p70
    %p72 = scmp.ne.s32.totalorder %s64, %s66
    %p73 = scmp.eq.s32.totalorder %s14, 1
    %p74 = por %p72, %p73
    %p75 = scmp.ne.s32.totalorder %s66, %s67
    %p76 = scmp.eq.s32.totalorder %s14, 0
    %p77 = por %p75, %p76
    %p78 = scmp.ne.s32.totalorder %s66, %s67
    %p79 = scmp.eq.s32.totalorder %s15, 1
    %p80 = por %p78, %p79
    %p82 = scmp.ne.s32.totalorder %s67, %s81
    %p83 = scmp.eq.s32.totalorder %s15, 0
    %p84 = por %p82, %p83
    %s85 = ssub.s32 %s9, %s16
    %p86 = scmp.eq.s32.totalorder %s85, 0
    %s88 = sadd.s32 %s87, 1
    %s89 = scalar_select %p86, %s87, %s88
    %p92 = pneg %p86
    %p93 = scmp.eq.s32.totalorder %s9, 1
    %p94 = por %p92, %p93
    %p95 = scmp.ne.s32.totalorder %s87, %s90
    %p96 = scmp.eq.s32.totalorder %s9, 0
    %p97 = por %p95, %p96
    %p98 = scmp.ne.s32.totalorder %s87, %s90
    %p99 = scmp.eq.s32.totalorder %s14, 1
    %p100 = por %p98, %p99
    %p101 = scmp.ne.s32.totalorder %s90, %s91
    %p102 = scmp.eq.s32.totalorder %s14, 0
    %p103 = por %p101, %p102
    %p104 = scmp.ne.s32.totalorder %s90, %s91
    %p105 = scmp.eq.s32.totalorder %s15, 1
    %p106 = por %p104, %p105
    %p108 = scmp.ne.s32.totalorder %s91, %s107
    %p109 = scmp.eq.s32.totalorder %s15, 0
    %p110 = por %p108, %p109
    %p111 = scmp.le.s32.totalorder 1, %s9
    %p112 = scmp.lt.s32.totalorder %s9, 3
    %p113 = pnand %p111, %p112
    %p114 = pneg %p113
    // Predicated region
    $region9: #{tpu_custom_call.1} parent=5 // pred_check
      _
    $region10: #{tpu_custom_call.1} parent=5 // pred_check_branch
      %116 = sbr.rel (%p113) target = $region12
    $region11: #{tpu_custom_call.1} parent=5 // pred_region
      %s117 = ssub.s32 %s9, 1
      // Predicated region
      $region13: #{tpu_custom_call.1} parent=11 // pred_check
        %p118 = pneg %p56
      $region14: #{tpu_custom_call.1} parent=11 // pred_check_branch
        %120 = sbr.rel (%p118) target = $region16
      $region15: #{tpu_custom_call.1} parent=11 // pred_region
        _
      $region16: #{tpu_custom_call.1} parent=11 // pred_fallthru
        _
      // Predicated region
      $region17: #{tpu_custom_call.1} parent=11 // pred_check
        %p121 = pneg %p77
      $region18: #{tpu_custom_call.1} parent=11 // pred_check_branch
        %123 = sbr.rel (%p121) target = $region20
      $region19: #{tpu_custom_call.1} parent=11 // pred_region
        _
      $region20: #{tpu_custom_call.1} parent=11 // pred_fallthru
        _
    $region12: #{tpu_custom_call.1} parent=5 // pred_fallthru
      _
    %p124 = scmp.lt.s32.totalorder %s9, 2
    // Predicated region
    $region21: #{tpu_custom_call.1} parent=5 // pred_check
      %p125 = pneg %p124
    $region22: #{tpu_custom_call.1} parent=5 // pred_check_branch
      %127 = sbr.rel (%p125) target = $region24
    $region23: #{tpu_custom_call.1} parent=5 // pred_region
      // Predicated region
      $region25: #{tpu_custom_call.1} parent=23 // pred_check
        %p128 = pneg %p29
      $region26: #{tpu_custom_call.1} parent=23 // pred_check_branch
        %130 = sbr.rel (%p128) target = $region28
      $region27: #{tpu_custom_call.1} parent=23 // pred_region
        %s131 = smul.u32 16, %s9
        %p132 = scmp.lt.s32.totalorder %s131, 31
        %s133 = scalar_select %p132, %s131, 31
        %s134 = smul.addr %s133, 4
        %s135 = scalar_lea.vmem %s0, %s134
        %s136 = smul.u32 16, %s9
      $region28: #{tpu_custom_call.1} parent=23 // pred_fallthru
        _
    $region24: #{tpu_custom_call.1} parent=5 // pred_fallthru
      _
    %p137 = scmp.le.s32.totalorder 1, %s9
    %p138 = scmp.lt.s32.totalorder %s9, 3
    %p139 = pnand %p137, %p138
    %p140 = pneg %p139
    // Predicated region
    $region29: #{tpu_custom_call.1} parent=5 // pred_check
      _
    $region30: #{tpu_custom_call.1} parent=5 // pred_check_branch
      %142 = sbr.rel (%p139) target = $region32
    $region31: #{tpu_custom_call.1} parent=5 // pred_region
      %s143 = ssub.s32 %s9, 1
      %s144 = smul.u32 16, %s14
      %p145 = scmp.lt.s32.totalorder %s144, 31
      %s146 = scalar_select %p145, %s144, 31
      %s147 = smul.addr %s146, 4
      %s148 = scalar_lea.vmem %s0, %s147
      %p149 = pneg %p35
      %p150 = pneg %p32
      %p151 = pneg %p56
      %p152 = pneg %p53
      %p153 = pneg %p77
      %p154 = pneg %p74
      %p155 = pneg %p103
      %p156 = pneg %p100
      %s157 = smul.u32 16, %s14
      %p158 = scmp.lt.s32.totalorder %s157, 31
      %s159 = scalar_select %p158, %s157, 31
      %s160 = smul.addr %s159, 8
      %s161 = scalar_lea.vmem %s3, %s160
      %s162 = smul.u32 16, %s14
      %p163 = scmp.lt.s32.totalorder %s162, 31
      %s164 = scalar_select %p163, %s162, 31
      %s165 = smul.addr %s164, 4
      %s166 = scalar_lea.vmem %s0, %s165
      %s167 = smul.u32 16, %s14
      %s168 = smul.u32 16, %s14
      %p169 = scmp.lt.s32.totalorder %s168, 31
      %s170 = scalar_select %p169, %s168, 31
      %s171 = smul.addr %s170, 8
      %s172 = scalar_lea.vmem %s3, %s171
      %s173 = smul.u32 16, %s14
      %v175 = vld [vmem:[%s166] sm:$0xf]
      %v176 = vld [vmem:[%s166 + $0x4] sm:$0xf]
      %v177 = vld [vmem:[%s166 + $0x8] sm:$0xf]
      %v178 = vld [vmem:[%s166 + $0xc] sm:$0xf]
      %v179 = vld [vmem:[%s166 + $0x10] sm:$0xf]
      %v180 = vld [vmem:[%s166 + $0x14] sm:$0xf]
      %v181 = vld [vmem:[%s166 + $0x18] sm:$0xf]
      %v182 = vld [vmem:[%s166 + $0x1c] sm:$0xf]
      %v183 = vld [vmem:[%s166 + $0x20] sm:$0xf]
      %v184 = vld [vmem:[%s166 + $0x24] sm:$0xf]
      %v185 = vld [vmem:[%s166 + $0x28] sm:$0xf]
      %v186 = vld [vmem:[%s166 + $0x2c] sm:$0xf]
      %v187 = vld [vmem:[%s166 + $0x30] sm:$0xf]
      %v188 = vld [vmem:[%s166 + $0x34] sm:$0xf]
      %v189 = vld [vmem:[%s166 + $0x38] sm:$0xf]
      %v190 = vld [vmem:[%s166 + $0x3c] sm:$0xf]
      %v191 = vld [vmem:[%s1] sm:$0xf]
      %v192 = vld [vmem:[%s1 + $0x4] sm:$0xf]
      %v193 = vld [vmem:[%s1 + $0x8] sm:$0xf]
      %v194 = vld [vmem:[%s1 + $0xc] sm:$0xf]
      %v195 = vld [vmem:[%s2] sm:$0x1]
      %v197 = vperm.slane %v195, 0
      %v215 = vunpack.c.l.b16 %v175
      %v216 = vunpack.c.l.b16 %v176
      %v217 = vunpack.c.l.b16 %v177
      %v218 = vunpack.c.l.b16 %v178
      %v219 = vunpack.c.l.b16 %v179
      %v220 = vunpack.c.l.b16 %v180
      %v221 = vunpack.c.l.b16 %v181
      %v222 = vunpack.c.l.b16 %v182
      %v223 = vunpack.c.l.b16 %v183
      %v224 = vunpack.c.l.b16 %v184
      %v225 = vunpack.c.l.b16 %v185
      %v226 = vunpack.c.l.b16 %v186
      %v227 = vunpack.c.l.b16 %v187
      %v228 = vunpack.c.l.b16 %v188
      %v229 = vunpack.c.l.b16 %v189
      %v230 = vunpack.c.l.b16 %v190
      %v231 = vpack.c.b16 %v216, %v215
      %v232 = vpack.c.b16 %v218, %v217
      %v233 = vpack.c.b16 %v220, %v219
      %v234 = vpack.c.b16 %v222, %v221
      %v235 = vpack.c.b16 %v224, %v223
      %v236 = vpack.c.b16 %v226, %v225
      %v237 = vpack.c.b16 %v228, %v227
      %v238 = vpack.c.b16 %v230, %v229
      %v243 = vunpack.c.l.b16 %v191
      %v244 = vunpack.c.l.b16 %v192
      %v245 = vunpack.c.l.b16 %v193
      %v246 = vunpack.c.l.b16 %v194
      %v247 = vpack.c.b16 %v244, %v243
      %v248 = vpack.c.b16 %v246, %v245
      %vm251 = vcmask 261120
      %v253 = vsel %vm251, %v231, 0
      %v256 = vsel %vm251, %v232, 0
      %v259 = vsel %vm251, %v233, 0
      %v262 = vsel %vm251, %v234, 0
      %v265 = vsel %vm251, %v235, 0
      %v268 = vsel %vm251, %v236, 0
      %v271 = vsel %vm251, %v237, 0
      %v274 = vsel %vm251, %v238, 0
      %276 = vmatpush.bf16.msra.mxu0 0
      %277 = vmatpush.bf16.msra.mxu0 0
      %278 = vmatpush.bf16.msra.mxu0 0
      %279 = vmatpush.bf16.msra.mxu0 0
      %280 = vmatpush.bf16.msra.mxu0 0
      %281 = vmatpush.bf16.msra.mxu0 0
      %282 = vmatpush.bf16.msra.mxu0 %v248
      %283 = vmatpush.bf16.msra.mxu0 %v247
      %284 = vmatmul.bf16.gmra.mxu0 %v253
      %v285 = vpop.f32.mrf.mxu0
      %v286 = vadd.f32 %v197, %v285
      %v287 = vpop.f32.mrf.mxu0
      %v288 = vadd.f32 %v197, %v287
      %289 = vmatmul.bf16.gmra.mxu0 %v256
      %v290 = vpop.f32.mrf.mxu0
      %v291 = vadd.f32 %v197, %v290
      %v292 = vpop.f32.mrf.mxu0
      %v293 = vadd.f32 %v197, %v292
      %294 = vmatmul.bf16.gmra.mxu0 %v259
      %v295 = vpop.f32.mrf.mxu0
      %v296 = vadd.f32 %v197, %v295
      %v297 = vpop.f32.mrf.mxu0
      %v298 = vadd.f32 %v197, %v297
      %299 = vmatmul.bf16.gmra.mxu0 %v262
      %v300 = vpop.f32.mrf.mxu0
      %v301 = vadd.f32 %v197, %v300
      %v302 = vpop.f32.mrf.mxu0
      %v303 = vadd.f32 %v197, %v302
      %304 = vmatmul.bf16.gmra.mxu0 %v265
      %v305 = vpop.f32.mrf.mxu0
      %v306 = vadd.f32 %v197, %v305
      %v307 = vpop.f32.mrf.mxu0
      %v308 = vadd.f32 %v197, %v307
      %309 = vmatmul.bf16.gmra.mxu0 %v268
      %v310 = vpop.f32.mrf.mxu0
      %v311 = vadd.f32 %v197, %v310
      %v312 = vpop.f32.mrf.mxu0
      %v313 = vadd.f32 %v197, %v312
      %314 = vmatmul.bf16.gmra.mxu0 %v271
      %v315 = vpop.f32.mrf.mxu0
      %v316 = vadd.f32 %v197, %v315
      %v317 = vpop.f32.mrf.mxu0
      %v318 = vadd.f32 %v197, %v317
      %319 = vmatmul.bf16.gmra.mxu0 %v274
      %v320 = vpop.f32.mrf.mxu0
      %v321 = vadd.f32 %v197, %v320
      %v322 = vpop.f32.mrf.mxu0
      %v323 = vadd.f32 %v197, %v322
      %324 = vdwg.mxu0
      %v325 = vmax.f32 %v286, 0.0
      %v326 = vmax.f32 %v288, 0.0
      %v327 = vmax.f32 %v291, 0.0
      %v328 = vmax.f32 %v293, 0.0
      %v329 = vmax.f32 %v296, 0.0
      %v330 = vmax.f32 %v298, 0.0
      %v331 = vmax.f32 %v301, 0.0
      %v332 = vmax.f32 %v303, 0.0
      %v333 = vmax.f32 %v306, 0.0
      %v334 = vmax.f32 %v308, 0.0
      %v335 = vmax.f32 %v311, 0.0
      %v336 = vmax.f32 %v313, 0.0
      %v337 = vmax.f32 %v316, 0.0
      %v338 = vmax.f32 %v318, 0.0
      %v339 = vmax.f32 %v321, 0.0
      %v340 = vmax.f32 %v323, 0.0
      %v341 = vpack.c.bf16 %v326, %v325
      %v342 = vpack.c.bf16 %v328, %v327
      %v343 = vpack.c.bf16 %v330, %v329
      %v344 = vpack.c.bf16 %v332, %v331
      %v345 = vpack.c.bf16 %v334, %v333
      %v346 = vpack.c.bf16 %v336, %v335
      %v347 = vpack.c.bf16 %v338, %v337
      %v348 = vpack.c.bf16 %v340, %v339
      %s349 = scalar_lea.vmem %s1, 16
      %v350 = vld [vmem:[%s349] sm:$0xf]
      %v351 = vld [vmem:[%s349 + $0x4] sm:$0xf]
      %v352 = vld [vmem:[%s349 + $0x8] sm:$0xf]
      %v353 = vld [vmem:[%s349 + $0xc] sm:$0xf]
      %s354 = scalar_lea.vmem %s2, 1
      %v355 = vld [vmem:[%s354] sm:$0x1]
      %v357 = vperm.slane %v355, 0
      %v363 = vunpack.c.l.b16 %v350
      %v364 = vunpack.c.l.b16 %v351
      %v365 = vunpack.c.l.b16 %v352
      %v366 = vunpack.c.l.b16 %v353
      %v367 = vpack.c.b16 %v364, %v363
      %v368 = vpack.c.b16 %v366, %v365
      %v372 = vsel %vm251, %v341, 0
      %v375 = vsel %vm251, %v342, 0
      %v378 = vsel %vm251, %v343, 0
      %v381 = vsel %vm251, %v344, 0
      %v384 = vsel %vm251, %v345, 0
      %v387 = vsel %vm251, %v346, 0
      %v390 = vsel %vm251, %v347, 0
      %v393 = vsel %vm251, %v348, 0
      %395 = vmatpush.bf16.msra.mxu0 0
      %396 = vmatpush.bf16.msra.mxu0 0
      %397 = vmatpush.bf16.msra.mxu0 0
      %398 = vmatpush.bf16.msra.mxu0 0
      %399 = vmatpush.bf16.msra.mxu0 0
      %400 = vmatpush.bf16.msra.mxu0 0
      %401 = vmatpush.bf16.msra.mxu0 %v368
      %402 = vmatpush.bf16.msra.mxu0 %v367
      %403 = vmatmul.bf16.gmra.mxu0 %v372
      %v404 = vpop.f32.mrf.mxu0
      %v405 = vadd.f32 %v357, %v404
      %v406 = vpop.f32.mrf.mxu0
      %v407 = vadd.f32 %v357, %v406
      %408 = vmatmul.bf16.gmra.mxu0 %v375
      %v409 = vpop.f32.mrf.mxu0
      %v410 = vadd.f32 %v357, %v409
      %v411 = vpop.f32.mrf.mxu0
      %v412 = vadd.f32 %v357, %v411
      %413 = vmatmul.bf16.gmra.mxu0 %v378
      %v414 = vpop.f32.mrf.mxu0
      %v415 = vadd.f32 %v357, %v414
      %v416 = vpop.f32.mrf.mxu0
      %v417 = vadd.f32 %v357, %v416
      %418 = vmatmul.bf16.gmra.mxu0 %v381
      %v419 = vpop.f32.mrf.mxu0
      %v420 = vadd.f32 %v357, %v419
      %v421 = vpop.f32.mrf.mxu0
      %v422 = vadd.f32 %v357, %v421
      %423 = vmatmul.bf16.gmra.mxu0 %v384
      %v424 = vpop.f32.mrf.mxu0
      %v425 = vadd.f32 %v357, %v424
      %v426 = vpop.f32.mrf.mxu0
      %v427 = vadd.f32 %v357, %v426
      %428 = vmatmul.bf16.gmra.mxu0 %v387
      %v429 = vpop.f32.mrf.mxu0
      %v430 = vadd.f32 %v357, %v429
      %v431 = vpop.f32.mrf.mxu0
      %v432 = vadd.f32 %v357, %v431
      %433 = vmatmul.bf16.gmra.mxu0 %v390
      %v434 = vpop.f32.mrf.mxu0
      %v435 = vadd.f32 %v357, %v434
      %v436 = vpop.f32.mrf.mxu0
      %v437 = vadd.f32 %v357, %v436
      %438 = vmatmul.bf16.gmra.mxu0 %v393
      %v439 = vpop.f32.mrf.mxu0
      %v440 = vadd.f32 %v357, %v439
      %v441 = vpop.f32.mrf.mxu0
      %v442 = vadd.f32 %v357, %v441
      %443 = vdwg.mxu0
      %v444 = vmax.f32 %v405, 0.0
      %v445 = vmax.f32 %v407, 0.0
      %v446 = vmax.f32 %v410, 0.0
      %v447 = vmax.f32 %v412, 0.0
      %v448 = vmax.f32 %v415, 0.0
      %v449 = vmax.f32 %v417, 0.0
      %v450 = vmax.f32 %v420, 0.0
      %v451 = vmax.f32 %v422, 0.0
      %v452 = vmax.f32 %v425, 0.0
      %v453 = vmax.f32 %v427, 0.0
      %v454 = vmax.f32 %v430, 0.0
      %v455 = vmax.f32 %v432, 0.0
      %v456 = vmax.f32 %v435, 0.0
      %v457 = vmax.f32 %v437, 0.0
      %v458 = vmax.f32 %v440, 0.0
      %v459 = vmax.f32 %v442, 0.0
      %v460 = vpack.c.bf16 %v444, %v444
      %v461 = vpack.c.bf16 %v445, %v445
      %v462 = vpack.c.bf16 %v446, %v446
      %v463 = vpack.c.bf16 %v447, %v447
      %v464 = vpack.c.bf16 %v448, %v448
      %v465 = vpack.c.bf16 %v449, %v449
      %v466 = vpack.c.bf16 %v450, %v450
      %v467 = vpack.c.bf16 %v451, %v451
      %v468 = vpack.c.bf16 %v452, %v452
      %v469 = vpack.c.bf16 %v453, %v453
      %v470 = vpack.c.bf16 %v454, %v454
      %v471 = vpack.c.bf16 %v455, %v455
      %v472 = vpack.c.bf16 %v456, %v456
      %v473 = vpack.c.bf16 %v457, %v457
      %v474 = vpack.c.bf16 %v458, %v458
      %v475 = vpack.c.bf16 %v459, %v459
      %s476 = scalar_lea.vmem %s1, 32
      %v477 = vld [vmem:[%s476] sm:$0x1]
      %v478 = vunpack.c.l.bf16 %v477
      %v479 = vunpack.c.l.bf16 %v460
      %v480 = vunpack.c.l.bf16 %v461
      %v481 = vunpack.c.l.bf16 %v462
      %v482 = vunpack.c.l.bf16 %v463
      %v483 = vunpack.c.l.bf16 %v464
      %v484 = vunpack.c.l.bf16 %v465
      %v485 = vunpack.c.l.bf16 %v466
      %v486 = vunpack.c.l.bf16 %v467
      %v487 = vunpack.c.l.bf16 %v468
      %v488 = vunpack.c.l.bf16 %v469
      %v489 = vunpack.c.l.bf16 %v470
      %v490 = vunpack.c.l.bf16 %v471
      %v491 = vunpack.c.l.bf16 %v472
      %v492 = vunpack.c.l.bf16 %v473
      %v493 = vunpack.c.l.bf16 %v474
      %v494 = vunpack.c.l.bf16 %v475
      %v495 = vperm.slane %v478, 0
      %v496 = vmul.f32 %v479, %v495
      %v497 = vmul.f32 %v480, %v495
      %v498 = vmul.f32 %v481, %v495
      %v499 = vmul.f32 %v482, %v495
      %v500 = vmul.f32 %v483, %v495
      %v501 = vmul.f32 %v484, %v495
      %v502 = vmul.f32 %v485, %v495
      %v503 = vmul.f32 %v486, %v495
      %v504 = vmul.f32 %v487, %v495
      %v505 = vmul.f32 %v488, %v495
      %v506 = vmul.f32 %v489, %v495
      %v507 = vmul.f32 %v490, %v495
      %v508 = vmul.f32 %v491, %v495
      %v509 = vmul.f32 %v492, %v495
      %v510 = vmul.f32 %v493, %v495
      %v511 = vmul.f32 %v494, %v495
      %v512 = vsel %vm251, %v496, 0.0
      %513 = vadd.xlane.f32.xlu0 %v512
      %v514 = vpop.xlane.xlu0 %513
      %v515 = vsel %vm251, %v497, 0.0
      %516 = vadd.xlane.f32.xlu0 %v515
      %v517 = vpop.xlane.xlu0 %516
      %v518 = vsel %vm251, %v498, 0.0
      %519 = vadd.xlane.f32.xlu0 %v518
      %v520 = vpop.xlane.xlu0 %519
      %v521 = vsel %vm251, %v499, 0.0
      %522 = vadd.xlane.f32.xlu0 %v521
      %v523 = vpop.xlane.xlu0 %522
      %v524 = vsel %vm251, %v500, 0.0
      %525 = vadd.xlane.f32.xlu0 %v524
      %v526 = vpop.xlane.xlu0 %525
      %v527 = vsel %vm251, %v501, 0.0
      %528 = vadd.xlane.f32.xlu0 %v527
      %v529 = vpop.xlane.xlu0 %528
      %v530 = vsel %vm251, %v502, 0.0
      %531 = vadd.xlane.f32.xlu0 %v530
      %v532 = vpop.xlane.xlu0 %531
      %v533 = vsel %vm251, %v503, 0.0
      %534 = vadd.xlane.f32.xlu0 %v533
      %v535 = vpop.xlane.xlu0 %534
      %v536 = vsel %vm251, %v504, 0.0
      %537 = vadd.xlane.f32.xlu0 %v536
      %v538 = vpop.xlane.xlu0 %537
      %v539 = vsel %vm251, %v505, 0.0
      %540 = vadd.xlane.f32.xlu0 %v539
      %v541 = vpop.xlane.xlu0 %540
      %v542 = vsel %vm251, %v506, 0.0
      %543 = vadd.xlane.f32.xlu0 %v542
      %v544 = vpop.xlane.xlu0 %543
      %v545 = vsel %vm251, %v507, 0.0
      %546 = vadd.xlane.f32.xlu0 %v545
      %v547 = vpop.xlane.xlu0 %546
      %v548 = vsel %vm251, %v508, 0.0
      %549 = vadd.xlane.f32.xlu0 %v548
      %v550 = vpop.xlane.xlu0 %549
      %v551 = vsel %vm251, %v509, 0.0
      %552 = vadd.xlane.f32.xlu0 %v551
      %v553 = vpop.xlane.xlu0 %552
      %v554 = vsel %vm251, %v510, 0.0
      %555 = vadd.xlane.f32.xlu0 %v554
      %v556 = vpop.xlane.xlu0 %555
      %v557 = vsel %vm251, %v511, 0.0
      %558 = vadd.xlane.f32.xlu0 %v557
      %v559 = vpop.xlane.xlu0 %558
      %s560 = scalar_lea.vmem %s2, 2
      %v561 = vld [vmem:[%s560] sm:$0x1]
      %v563 = vperm.slane %v561, 0
      %v565 = vadd.f32 %v514, %v563
      %v566 = vadd.f32 %v517, %v563
      %v567 = vadd.f32 %v520, %v563
      %v568 = vadd.f32 %v523, %v563
      %v569 = vadd.f32 %v526, %v563
      %v570 = vadd.f32 %v529, %v563
      %v571 = vadd.f32 %v532, %v563
      %v572 = vadd.f32 %v535, %v563
      %v573 = vadd.f32 %v538, %v563
      %v574 = vadd.f32 %v541, %v563
      %v575 = vadd.f32 %v544, %v563
      %v576 = vadd.f32 %v547, %v563
      %v577 = vadd.f32 %v550, %v563
      %v578 = vadd.f32 %v553, %v563
      %v579 = vadd.f32 %v556, %v563
      %v580 = vadd.f32 %v559, %v563
      %vm581 = vcmask 7168
      %582 = vst.msk [vmem:[%s172] sm:$0xff] %vm581, %v565
      %583 = vst.msk [vmem:[%s172 + $0x8] sm:$0xff] %vm581, %v566
      %584 = vst.msk [vmem:[%s172 + $0x10] sm:$0xff] %vm581, %v567
      %585 = vst.msk [vmem:[%s172 + $0x18] sm:$0xff] %vm581, %v568
      %586 = vst.msk [vmem:[%s172 + $0x20] sm:$0xff] %vm581, %v569
      %587 = vst.msk [vmem:[%s172 + $0x28] sm:$0xff] %vm581, %v570
      %588 = vst.msk [vmem:[%s172 + $0x30] sm:$0xff] %vm581, %v571
      %589 = vst.msk [vmem:[%s172 + $0x38] sm:$0xff] %vm581, %v572
      %590 = vst.msk [vmem:[%s172 + $0x40] sm:$0xff] %vm581, %v573
      %591 = vst.msk [vmem:[%s172 + $0x48] sm:$0xff] %vm581, %v574
      %592 = vst.msk [vmem:[%s172 + $0x50] sm:$0xff] %vm581, %v575
      %593 = vst.msk [vmem:[%s172 + $0x58] sm:$0xff] %vm581, %v576
      %594 = vst.msk [vmem:[%s172 + $0x60] sm:$0xff] %vm581, %v577
      %595 = vst.msk [vmem:[%s172 + $0x68] sm:$0xff] %vm581, %v578
      %596 = vst.msk [vmem:[%s172 + $0x70] sm:$0xff] %vm581, %v579
      %597 = vst.msk [vmem:[%s172 + $0x78] sm:$0xff] %vm581, %v580
      %s598 = smul.u32 16, %s14
      %p599 = scmp.lt.s32.totalorder %s598, 31
      %s600 = scalar_select %p599, %s598, 31
      %s601 = smul.addr %s600, 8
      %s602 = scalar_lea.vmem %s3, %s601
      // Predicated region
      $region33: #{tpu_custom_call.1} parent=31 // pred_check
        %p603 = pneg %p100
      $region34: #{tpu_custom_call.1} parent=31 // pred_check_branch
        %605 = sbr.rel (%p603) target = $region36
      $region35: #{tpu_custom_call.1} parent=31 // pred_region
        %s606 = smul.u32 16, %s14
      $region36: #{tpu_custom_call.1} parent=31 // pred_fallthru
        _
    $region32: #{tpu_custom_call.1} parent=5 // pred_fallthru
      _
    %p607 = scmp.le.s32.totalorder 2, %s9
    // Predicated region
    $region37: #{tpu_custom_call.1} parent=5 // pred_check
      %p608 = pneg %p607
    $region38: #{tpu_custom_call.1} parent=5 // pred_check_branch
      %610 = sbr.rel (%p608) target = $region40
    $region39: #{tpu_custom_call.1} parent=5 // pred_region
      %s611 = ssub.s32 %s9, 2
      // Predicated region
      $region41: #{tpu_custom_call.1} parent=39 // pred_check
        %p612 = pneg %p106
      $region42: #{tpu_custom_call.1} parent=39 // pred_check_branch
        %614 = sbr.rel (%p612) target = $region44
      $region43: #{tpu_custom_call.1} parent=39 // pred_region
        %s615 = smul.u32 16, %s15
        %p616 = scmp.lt.s32.totalorder %s615, 31
        %s617 = scalar_select %p616, %s615, 31
        %s618 = smul.addr %s617, 8
        %s619 = scalar_lea.vmem %s3, %s618
      $region44: #{tpu_custom_call.1} parent=39 // pred_fallthru
        _
    $region40: #{tpu_custom_call.1} parent=5 // pred_fallthru
      _
  $region6: #{tpu_custom_call.1} parent=0 // loop_footer
    %s13 = sadd.s32 1, %s9
  $region7: #{tpu_custom_call.1} parent=0 // loop_footer_branch
    %8 = sbr.rel target = $region3
  $region8: #{tpu_custom_call.1} parent=0 // loop_exit
    _

</llo_original>
